<compile_context>
chip_gen: v6e
topology: v6e:2x2x1
jax: 0.10.0
libtpu: 0.0.40
codegen_flags: <defaults>
</compile_context>

<pallas_src>
import functools

import jax
import jax.numpy as jnp
from jax.experimental import pallas as pl
from jax.experimental.pallas import tpu as pltpu

HIDDEN = 128
OUT_DIM = 28 * 28  # 784


# ----------------------------------------------------------------------------
# Fused MLP kernel: one batch tile per grid step, all three matmuls on the MXU
# with f32 accumulation, ReLU / sigmoid / *255 epilogues on the VPU/EUP.
# ----------------------------------------------------------------------------
def generator_kernel(z_ref, w1_ref, b1_ref, w2_ref, b2_ref, w3_ref, b3_ref,
                     o_ref):
    # z_ref : (TB, D)          w1_ref: (D, 128)    b1_ref: (1, 128)
    # w2_ref: (128, 128)       b2_ref: (1, 128)
    # w3_ref: (128, 784)       b3_ref: (1, 784)    o_ref : (TB, 784)
    h = jnp.dot(z_ref[...], w1_ref[...],
                preferred_element_type=jnp.float32) + b1_ref[0]
    h = jnp.maximum(h, 0.0)
    h = jnp.dot(h, w2_ref[...],
                preferred_element_type=jnp.float32) + b2_ref[0]
    h = jnp.maximum(h, 0.0)
    logits = jnp.dot(h, w3_ref[...],
                     preferred_element_type=jnp.float32) + b3_ref[0]
    # jax.nn.sigmoid lowers to exp + reciprocal on the EUP path; keeps the
    # epilogue off the VALU critical path while staying bit-close to the ref.
    o_ref[...] = jax.nn.sigmoid(logits) * 255.0


def _round_up(x, m):
    return ((x + m - 1) // m) * m


def img_generator_forward(z, params, batch_tile=128):
    """z: (N, input_dim) -> (N, 28, 28) float32 in [0, 255]."""
    z = z.astype(jnp.float32)
    n, d = z.shape

    # Batch tile: multiple of 8 (sublane), capped at `batch_tile`, bounded VMEM.
    tb = min(batch_tile, _round_up(n, 8))
    n_pad = _round_up(n, tb)
    if n_pad != n:
        z = jnp.pad(z, ((0, n_pad - n), (0, 0)))

    w1, b1 = params["w1"], params["b1"]
    w2, b2 = params["w2"], params["b2"]
    w3, b3 = params["w3"], params["b3"]

    out = pl.pallas_call(
        generator_kernel,
        out_shape=jax.ShapeDtypeStruct((n_pad, OUT_DIM), jnp.float32),
        grid=(pl.cdiv(n_pad, tb),),
        in_specs=[
            pl.BlockSpec((tb, d), lambda i: (i, 0)),            # z batch tile
            pl.BlockSpec((d, HIDDEN), lambda i: (0, 0)),         # w1 (resident)
            pl.BlockSpec((1, HIDDEN), lambda i: (0, 0)),         # b1
            pl.BlockSpec((HIDDEN, HIDDEN), lambda i: (0, 0)),    # w2
            pl.BlockSpec((1, HIDDEN), lambda i: (0, 0)),         # b2
            pl.BlockSpec((HIDDEN, OUT_DIM), lambda i: (0, 0)),   # w3
            pl.BlockSpec((1, OUT_DIM), lambda i: (0, 0)),        # b3
        ],
        out_specs=pl.BlockSpec((tb, OUT_DIM), lambda i: (i, 0)),
        compiler_params=pltpu.CompilerParams(
            dimension_semantics=("parallel",)),
    )(z, w1, b1, w2, b2, w3, b3)

    out = out[:n]
    # Contiguous reshape (metadata only) -- matches PyTorch .reshape(-1,28,28).
    return out.reshape(-1, 28, 28)


# ----------------------------------------------------------------------------
# Pure-JAX reference for a correctness sanity check.
# ----------------------------------------------------------------------------
def reference_forward(z, params):
    z = z.astype(jnp.float32)
    h = jnp.maximum(z @ params["w1"] + params["b1"][0], 0.0)
    h = jnp.maximum(h @ params["w2"] + params["b2"][0], 0.0)
    out = jax.nn.sigmoid(h @ params["w3"] + params["b3"][0])
    return out.reshape(-1, 28, 28) * 255.0


def init_params(key, input_dim):
    ks = jax.random.split(key, 6)
    # Weights stored (in, out), i.e. the transpose of PyTorch's (out, in).
    return {
        "w1": jax.random.normal(ks[0], (input_dim, HIDDEN), jnp.float32) * 0.10,
        "b1": jax.random.normal(ks[1], (1, HIDDEN), jnp.float32) * 0.05,
        "w2": jax.random.normal(ks[2], (HIDDEN, HIDDEN), jnp.float32) * 0.10,
        "b2": jax.random.normal(ks[3], (1, HIDDEN), jnp.float32) * 0.05,
        "w3": jax.random.normal(ks[4], (HIDDEN, OUT_DIM), jnp.float32) * 0.05,
        "b3": jax.random.normal(ks[5], (1, OUT_DIM), jnp.float32) * 0.05,
    }


if __name__ == "__main__":
    key = jax.random.PRNGKey(0)
    pkey, zkey = jax.random.split(key)

    input_dim = 64                       # latent dimension (module's input_dim)
    params = init_params(pkey, input_dim)

    # Small batch of latent codes.
    z = jax.random.normal(zkey, (2, input_dim), jnp.float32)

    fwd = jax.jit(functools.partial(img_generator_forward, params=params))
    out = jax.block_until_ready(fwd(z))
    ref = jax.block_until_ready(reference_forward(z, params))

    assert out.shape == (2, 28, 28), out.shape
    assert bool(jnp.all(jnp.isfinite(out)))
    max_err = float(jnp.max(jnp.abs(out - ref)))
    assert max_err < 5e-3, max_err

    print("KERNEL_OK")
</pallas_src>

<mosaic_0001>
module attributes {stable_mosaic.version = 11 : i64} {
  func.func @generator_kernel(%arg0: i32, %arg1: memref<8x64xf32, #tpu.memory_space<vmem>>, %arg2: memref<64x128xf32, #tpu.memory_space<vmem>>, %arg3: memref<1x128xf32, #tpu.memory_space<vmem>>, %arg4: memref<128x128xf32, #tpu.memory_space<vmem>>, %arg5: memref<1x128xf32, #tpu.memory_space<vmem>>, %arg6: memref<128x784xf32, #tpu.memory_space<vmem>>, %arg7: memref<1x784xf32, #tpu.memory_space<vmem>>, %arg8: memref<8x784xf32, #tpu.memory_space<vmem>>) attributes {dimension_semantics = [#tpu.dimension_semantics<parallel>], iteration_bounds = array<i64: 1>, scalar_prefetch = 0 : i64, scratch_operands = 0 : i64, tpu.core_type = #tpu.core_type<tc>, window_params = [{transform_indices = @transform_0, window_bounds = array<i64: 8, 64>}, {pipeline_mode = #tpu.pipeline_mode<synchronous>, transform_indices = @transform_1, window_bounds = array<i64: 64, 128>}, {pipeline_mode = #tpu.pipeline_mode<synchronous>, transform_indices = @transform_2, window_bounds = array<i64: 1, 128>}, {pipeline_mode = #tpu.pipeline_mode<synchronous>, transform_indices = @transform_3, window_bounds = array<i64: 128, 128>}, {pipeline_mode = #tpu.pipeline_mode<synchronous>, transform_indices = @transform_4, window_bounds = array<i64: 1, 128>}, {pipeline_mode = #tpu.pipeline_mode<synchronous>, transform_indices = @transform_5, window_bounds = array<i64: 128, 784>}, {pipeline_mode = #tpu.pipeline_mode<synchronous>, transform_indices = @transform_6, window_bounds = array<i64: 1, 784>}, {transform_indices = @transform_7, window_bounds = array<i64: 8, 784>}]} {
    %c0 = arith.constant 0 : index
    %c0_0 = arith.constant 0 : index
    %0 = vector.load %arg1[%c0, %c0_0] : memref<8x64xf32, #tpu.memory_space<vmem>>, vector<8x64xf32>
    %c0_1 = arith.constant 0 : index
    %c0_2 = arith.constant 0 : index
    %1 = vector.load %arg2[%c0_1, %c0_2] : memref<64x128xf32, #tpu.memory_space<vmem>>, vector<64x128xf32>
    %cst = arith.constant dense<0.000000e+00> : vector<8x128xf32>
    %2 = tpu.matmul %0, %1, %cst {dimension_numbers = #tpu.dot_dimension_numbers<[1], [0], [0], [1], [0, 0, 1, 1], [], []>} : vector<8x64xf32>, vector<64x128xf32>, vector<8x128xf32> -> vector<8x128xf32>
    %c0_3 = arith.constant 0 : index
    %c0_4 = arith.constant 0 : index
    %3 = vector.load %arg3[%c0_3, %c0_4] : memref<1x128xf32, #tpu.memory_space<vmem>>, vector<1x128xf32>
    %4 = vector.shape_cast %3 : vector<1x128xf32> to vector<128xf32>
    %5 = vector.shape_cast %4 : vector<128xf32> to vector<1x128xf32>
    %6 = vector.broadcast %5 : vector<1x128xf32> to vector<8x128xf32>
    %7 = arith.addf %2, %6 : vector<8x128xf32>
    %cst_5 = arith.constant 0.000000e+00 : f32
    %8 = vector.broadcast %cst_5 : f32 to vector<8x128xf32>
    %9 = arith.maximumf %7, %8 : vector<8x128xf32>
    %c0_6 = arith.constant 0 : index
    %c0_7 = arith.constant 0 : index
    %10 = vector.load %arg4[%c0_6, %c0_7] : memref<128x128xf32, #tpu.memory_space<vmem>>, vector<128x128xf32>
    %cst_8 = arith.constant dense<0.000000e+00> : vector<8x128xf32>
    %11 = tpu.matmul %9, %10, %cst_8 {dimension_numbers = #tpu.dot_dimension_numbers<[1], [0], [0], [1], [0, 0, 1, 1], [], []>} : vector<8x128xf32>, vector<128x128xf32>, vector<8x128xf32> -> vector<8x128xf32>
    %c0_9 = arith.constant 0 : index
    %c0_10 = arith.constant 0 : index
    %12 = vector.load %arg5[%c0_9, %c0_10] : memref<1x128xf32, #tpu.memory_space<vmem>>, vector<1x128xf32>
    %13 = vector.shape_cast %12 : vector<1x128xf32> to vector<128xf32>
    %14 = vector.shape_cast %13 : vector<128xf32> to vector<1x128xf32>
    %15 = vector.broadcast %14 : vector<1x128xf32> to vector<8x128xf32>
    %16 = arith.addf %11, %15 : vector<8x128xf32>
    %cst_11 = arith.constant 0.000000e+00 : f32
    %17 = vector.broadcast %cst_11 : f32 to vector<8x128xf32>
    %18 = arith.maximumf %16, %17 : vector<8x128xf32>
    %c0_12 = arith.constant 0 : index
    %c0_13 = arith.constant 0 : index
    %19 = vector.load %arg6[%c0_12, %c0_13] : memref<128x784xf32, #tpu.memory_space<vmem>>, vector<128x784xf32>
    %cst_14 = arith.constant dense<0.000000e+00> : vector<8x784xf32>
    %20 = tpu.matmul %18, %19, %cst_14 {dimension_numbers = #tpu.dot_dimension_numbers<[1], [0], [0], [1], [0, 0, 1, 1], [], []>} : vector<8x128xf32>, vector<128x784xf32>, vector<8x784xf32> -> vector<8x784xf32>
    %c0_15 = arith.constant 0 : index
    %c0_16 = arith.constant 0 : index
    %21 = vector.load %arg7[%c0_15, %c0_16] : memref<1x784xf32, #tpu.memory_space<vmem>>, vector<1x784xf32>
    %22 = vector.shape_cast %21 : vector<1x784xf32> to vector<784xf32>
    %23 = vector.shape_cast %22 : vector<784xf32> to vector<1x784xf32>
    %24 = vector.broadcast %23 : vector<1x784xf32> to vector<8x784xf32>
    %25 = arith.addf %20, %24 : vector<8x784xf32>
    %26 = arith.negf %25 : vector<8x784xf32>
    %27 = math.exp %26 : vector<8x784xf32>
    %cst_17 = arith.constant 1.000000e+00 : f32
    %28 = vector.broadcast %cst_17 : f32 to vector<8x784xf32>
    %29 = arith.addf %28, %27 : vector<8x784xf32>
    %30 = arith.divf %28, %29 : vector<8x784xf32>
    %cst_18 = arith.constant 2.550000e+02 : f32
    %31 = vector.broadcast %cst_18 : f32 to vector<8x784xf32>
    %32 = arith.mulf %30, %31 : vector<8x784xf32>
    %c0_19 = arith.constant 0 : index
    %c0_20 = arith.constant 0 : index
    %33 = vector.load %arg8[%c0_19, %c0_20] : memref<8x784xf32, #tpu.memory_space<vmem>>, vector<8x784xf32>
    tpu.vector_store %arg8[%c0_19, %c0_20], %32 {strides = array<i32>} : memref<8x784xf32, #tpu.memory_space<vmem>>, vector<8x784xf32>,
    return
  }
  func.func @transform_0(%arg0: i32) -> (i32, i32) {
    %c0_i32 = arith.constant 0 : i32
    %c0_i32_0 = arith.constant 0 : i32
    return %arg0, %c0_i32 : i32, i32
  }
  func.func @transform_1(%arg0: i32) -> (i32, i32) {
    %c0_i32 = arith.constant 0 : i32
    %c0_i32_0 = arith.constant 0 : i32
    %c0_i32_1 = arith.constant 0 : i32
    return %c0_i32, %c0_i32_0 : i32, i32
  }
  func.func @transform_2(%arg0: i32) -> (i32, i32) {
    %c0_i32 = arith.constant 0 : i32
    %c0_i32_0 = arith.constant 0 : i32
    %c0_i32_1 = arith.constant 0 : i32
    return %c0_i32, %c0_i32_0 : i32, i32
  }
  func.func @transform_3(%arg0: i32) -> (i32, i32) {
    %c0_i32 = arith.constant 0 : i32
    %c0_i32_0 = arith.constant 0 : i32
    %c0_i32_1 = arith.constant 0 : i32
    return %c0_i32, %c0_i32_0 : i32, i32
  }
  func.func @transform_4(%arg0: i32) -> (i32, i32) {
    %c0_i32 = arith.constant 0 : i32
    %c0_i32_0 = arith.constant 0 : i32
    %c0_i32_1 = arith.constant 0 : i32
    return %c0_i32, %c0_i32_0 : i32, i32
  }
  func.func @transform_5(%arg0: i32) -> (i32, i32) {
    %c0_i32 = arith.constant 0 : i32
    %c0_i32_0 = arith.constant 0 : i32
    %c0_i32_1 = arith.constant 0 : i32
    return %c0_i32, %c0_i32_0 : i32, i32
  }
  func.func @transform_6(%arg0: i32) -> (i32, i32) {
    %c0_i32 = arith.constant 0 : i32
    %c0_i32_0 = arith.constant 0 : i32
    %c0_i32_1 = arith.constant 0 : i32
    return %c0_i32, %c0_i32_0 : i32, i32
  }
  func.func @transform_7(%arg0: i32) -> (i32, i32) {
    %c0_i32 = arith.constant 0 : i32
    %c0_i32_0 = arith.constant 0 : i32
    return %arg0, %c0_i32 : i32, i32
  }
}

</mosaic_0001>

<llo_original>
// kernel: img_generator_forward.1
$region0: #{img_generator_forward.1}
  #allocation0 [shape = 'u32[]', space=smem, size = 0x4, offset = 0x4, fixed_abs, tag = 'smem constant byte address 0x4 - core index']
  #allocation1 [shape = 'u32[144,128]{1,0:T(1,128)}', space=vmem, size = 0x12000, scoped, tag = 'internal scratch']
  %s0 = inlined_call_operand.vmem [shape: f32[8,64], index: 0, kind: input, shape index: {}]
  %s1 = inlined_call_operand.hbm [shape: f32[64,128], index: 1, kind: input, shape index: {}]
  %s2 = inlined_call_operand.vmem [shape: f32[1,128], index: 2, kind: input, shape index: {}]
  %s3 = inlined_call_operand.hbm [shape: f32[128,128], index: 3, kind: input, shape index: {}]
  %s4 = inlined_call_operand.vmem [shape: f32[1,128], index: 4, kind: input, shape index: {}]
  %s5 = inlined_call_operand.hbm [shape: f32[128,784], index: 5, kind: input, shape index: {}]
  %s6 = inlined_call_operand.vmem [shape: f32[1,784], index: 6, kind: input, shape index: {}]
  %s7 = inlined_call_operand.vmem [shape: f32[8,784], index: 7, kind: output, shape index: {}]
  %s8 = sld [smem:[#allocation0]]
  $region50: #{img_generator_forward.1} parent=0
    _
  %s10 = ssub.s32 1, %s8
  %s11 = scalar_select 0, %s10, %s8
  $region1: #{img_generator_forward.1} parent=0
    #allocation2 [shape = 'u8[32768]{0}', space=vmem, size = 0x8000, scoped, tag = 'input window, operand 1, single buffered']
    #allocation3 [shape = 's32[1]{0}', space=sflag, size = 0x4, scoped, tag = 'scoped memory for img_generator_forward.1']
    #allocation4 [shape = 'u8[65536]{0}', space=vmem, size = 0x10000, scoped, tag = 'input window, operand 3, single buffered']
    #allocation5 [shape = 's32[1]{0}', space=sflag, size = 0x4, scoped, tag = 'scoped memory for img_generator_forward.1']
    #allocation6 [shape = 'u8[458752]{0}', space=vmem, size = 0x70000, scoped, tag = 'input window, operand 5, single buffered']
    %12 = vsyncpa [#allocation3], 0
    %13 = vsyncpa [#allocation5], 0
    // Predicated region
    $region2: #{img_generator_forward.1} parent=1 // pred_check
      _
    $region3: #{img_generator_forward.1} parent=1 // pred_check_branch
      %15 = sbr.rel (0) target = $region5
    $region4: #{img_generator_forward.1} parent=1 // pred_region
      _
    $region5: #{img_generator_forward.1} parent=1 // pred_fallthru
      _
    // Predicated region
    $region6: #{img_generator_forward.1} parent=1 // pred_check
      _
    $region7: #{img_generator_forward.1} parent=1 // pred_check_branch
      %17 = sbr.rel (0) target = $region9
    $region8: #{img_generator_forward.1} parent=1 // pred_region
      %s19 = ssub.s32 1024, 1024
      %20 = vsyncadd [#allocation3], %s19
      %s21 = sshll.u32 [#allocation2], 4
      %s22 = int_to_ptr.vmem [resolvable:$true] %s21
      %27 = dma.hbm_to_vmem [thread:$0]  %s1, 1024, %s22, [#allocation3], 128, 128, 8
    $region9: #{img_generator_forward.1} parent=1 // pred_fallthru
      _
    // Predicated region
    $region10: #{img_generator_forward.1} parent=1 // pred_check
      _
    $region11: #{img_generator_forward.1} parent=1 // pred_check_branch
      %29 = sbr.rel (0) target = $region13
    $region12: #{img_generator_forward.1} parent=1 // pred_region
      _
    $region13: #{img_generator_forward.1} parent=1 // pred_fallthru
      _
    // Predicated region
    $region14: #{img_generator_forward.1} parent=1 // pred_check
      _
    $region15: #{img_generator_forward.1} parent=1 // pred_check_branch
      %31 = sbr.rel (0) target = $region17
    $region16: #{img_generator_forward.1} parent=1 // pred_region
      %s33 = ssub.s32 2048, 2048
      %34 = vsyncadd [#allocation5], %s33
      %s35 = sshll.u32 [#allocation4], 4
      %s36 = int_to_ptr.vmem [resolvable:$true] %s35
      %41 = dma.hbm_to_vmem [thread:$0]  %s3, 2048, %s36, [#allocation5], 128, 128, 8
    $region17: #{img_generator_forward.1} parent=1 // pred_fallthru
      _
    // Predicated region
    $region18: #{img_generator_forward.1} parent=1 // pred_check
      _
    $region19: #{img_generator_forward.1} parent=1 // pred_check_branch
      %43 = sbr.rel (0) target = $region21
    $region20: #{img_generator_forward.1} parent=1 // pred_region
      _
    $region21: #{img_generator_forward.1} parent=1 // pred_fallthru
      _
    // Predicated region
    $region22: #{img_generator_forward.1} parent=1 // pred_check
      _
    $region23: #{img_generator_forward.1} parent=1 // pred_check_branch
      %45 = sbr.rel (0) target = $region25
    $region24: #{img_generator_forward.1} parent=1 // pred_region
      %s47 = ssub.s32 14336, 14336
      %48 = vsyncadd [#allocation5], %s47
      %s49 = sshll.u32 [#allocation6], 4
      %s50 = int_to_ptr.vmem [resolvable:$true] %s49
      %55 = dma.hbm_to_vmem [thread:$0]  %s5, 14336, %s50, [#allocation5], 896, 896, 56
    $region25: #{img_generator_forward.1} parent=1 // pred_fallthru
      _
    // Predicated region
    $region26: #{img_generator_forward.1} parent=1 // pred_check
      _
    $region27: #{img_generator_forward.1} parent=1 // pred_check_branch
      %57 = sbr.rel (0) target = $region29
    $region28: #{img_generator_forward.1} parent=1 // pred_region
      _
    $region29: #{img_generator_forward.1} parent=1 // pred_fallthru
      _
    // Predicated region
    $region30: #{img_generator_forward.1} parent=1 // pred_check
      _
    $region31: #{img_generator_forward.1} parent=1 // pred_check_branch
      %59 = sbr.rel (0) target = $region33
    $region32: #{img_generator_forward.1} parent=1 // pred_region
      %60 = dma.done [#allocation3], 1024
    $region33: #{img_generator_forward.1} parent=1 // pred_fallthru
      _
    // Predicated region
    $region34: #{img_generator_forward.1} parent=1 // pred_check
      _
    $region35: #{img_generator_forward.1} parent=1 // pred_check_branch
      %62 = sbr.rel (0) target = $region37
    $region36: #{img_generator_forward.1} parent=1 // pred_region
      %63 = dma.done [#allocation5], 2048
    $region37: #{img_generator_forward.1} parent=1 // pred_fallthru
      _
    // Predicated region
    $region38: #{img_generator_forward.1} parent=1 // pred_check
      _
    $region39: #{img_generator_forward.1} parent=1 // pred_check_branch
      %65 = sbr.rel (0) target = $region41
    $region40: #{img_generator_forward.1} parent=1 // pred_region
      %66 = dma.done [#allocation5], 14336
    $region41: #{img_generator_forward.1} parent=1 // pred_fallthru
      _
    %v67 = vld [vmem:[%s0] sm:$0xff]
    %v68 = vld [vmem:[#allocation2] sm:$0xff]
    %v69 = vld [vmem:[#allocation2 + $0x8] sm:$0xff]
    %v70 = vld [vmem:[#allocation2 + $0x10] sm:$0xff]
    %v71 = vld [vmem:[#allocation2 + $0x18] sm:$0xff]
    %v72 = vld [vmem:[#allocation2 + $0x20] sm:$0xff]
    %v73 = vld [vmem:[#allocation2 + $0x28] sm:$0xff]
    %v74 = vld [vmem:[#allocation2 + $0x30] sm:$0xff]
    %v75 = vld [vmem:[#allocation2 + $0x38] sm:$0xff]
    %v76 = vld [vmem:[%s2] sm:$0x1]
    %v78 = vlaneseq
    %v79 = vshrl.u32 %v78, 7
    %v80 = vsub.s32 0, %v79
    %v81 = vrot.slane %v76, %v80
    %vm83 = vcmask 523264
    %v85 = vsel %vm83, %v67, 0
    %87 = vmatprep.subr.mxu0 0.0
    %88 = vmatpush1.msra.mxu0 0.0
    %89 = vmatprep.subr.mxu0 0.0
    %90 = vmatpush1.msra.mxu0 0.0
    %91 = vmatprep.subr.mxu0 0.0
    %92 = vmatpush1.msra.mxu0 0.0
    %93 = vmatprep.subr.mxu0 0.0
    %94 = vmatpush1.msra.mxu0 0.0
    %95 = vmatprep.subr.mxu0 0.0
    %96 = vmatpush1.msra.mxu0 0.0
    %97 = vmatprep.subr.mxu0 0.0
    %98 = vmatpush1.msra.mxu0 0.0
    %99 = vmatprep.subr.mxu0 0.0
    %100 = vmatpush1.msra.mxu0 0.0
    %101 = vmatprep.subr.mxu0 0.0
    %102 = vmatpush1.msra.mxu0 0.0
    %103 = vmatprep.subr.mxu0 0.0
    %104 = vmatpush1.msra.mxu0 %v75
    %105 = vmatprep.subr.mxu0 0.0
    %106 = vmatpush1.msra.mxu0 %v74
    %107 = vmatprep.subr.mxu0 0.0
    %108 = vmatpush1.msra.mxu0 %v73
    %109 = vmatprep.subr.mxu0 0.0
    %110 = vmatpush1.msra.mxu0 %v72
    %111 = vmatprep.subr.mxu0 0.0
    %112 = vmatpush1.msra.mxu0 %v71
    %113 = vmatprep.subr.mxu0 0.0
    %114 = vmatpush1.msra.mxu0 %v70
    %115 = vmatprep.subr.mxu0 0.0
    %116 = vmatpush1.msra.mxu0 %v69
    %117 = vmatprep.subr.mxu0 0.0
    %118 = vmatpush1.msra.mxu0 %v68
    %119 = vmatprep.subr.mxu0 0.0
    %120 = vmatpush2.msra.mxu0 0.0
    %121 = vmatprep.subr.mxu0 0.0
    %122 = vmatpush2.msra.mxu0 0.0
    %123 = vmatprep.subr.mxu0 0.0
    %124 = vmatpush2.msra.mxu0 0.0
    %125 = vmatprep.subr.mxu0 0.0
    %126 = vmatpush2.msra.mxu0 0.0
    %127 = vmatprep.subr.mxu0 0.0
    %128 = vmatpush2.msra.mxu0 0.0
    %129 = vmatprep.subr.mxu0 0.0
    %130 = vmatpush2.msra.mxu0 0.0
    %131 = vmatprep.subr.mxu0 0.0
    %132 = vmatpush2.msra.mxu0 0.0
    %133 = vmatprep.subr.mxu0 0.0
    %134 = vmatpush2.msra.mxu0 0.0
    %135 = vmatprep.subr.mxu0 0.0
    %136 = vmatpush2.msra.mxu0 0.0
    %137 = vmatprep.subr.mxu0 0.0
    %138 = vmatpush2.msra.mxu0 0.0
    %139 = vmatprep.subr.mxu0 0.0
    %140 = vmatpush2.msra.mxu0 0.0
    %141 = vmatprep.subr.mxu0 0.0
    %142 = vmatpush2.msra.mxu0 0.0
    %143 = vmatprep.subr.mxu0 0.0
    %144 = vmatpush2.msra.mxu0 0.0
    %145 = vmatprep.subr.mxu0 0.0
    %146 = vmatpush2.msra.mxu0 0.0
    %147 = vmatprep.subr.mxu0 0.0
    %148 = vmatpush2.msra.mxu0 0.0
    %149 = vmatprep.subr.mxu0 0.0
    %150 = vmatpush2.msra.mxu0 0.0
    %151 = vmatprep.mubr.f32.mxu0 0.0
    %152 = vmatmul.mubr.f32.gmra.mxu0 %v85
    %v153 = vpop.f32.mrf.mxu0
    %v154 = vadd.f32 %v81, %v153
    %v155 = vpop.f32.mrf.mxu0
    %156 = vdwg.mxu0
    %v157 = vmax.f32 %v154, 0.0
    %v158 = vld [vmem:[#allocation4] sm:$0xff]
    %v159 = vld [vmem:[#allocation4 + $0x8] sm:$0xff]
    %v160 = vld [vmem:[#allocation4 + $0x10] sm:$0xff]
    %v161 = vld [vmem:[#allocation4 + $0x18] sm:$0xff]
    %v162 = vld [vmem:[#allocation4 + $0x20] sm:$0xff]
    %v163 = vld [vmem:[#allocation4 + $0x28] sm:$0xff]
    %v164 = vld [vmem:[#allocation4 + $0x30] sm:$0xff]
    %v165 = vld [vmem:[#allocation4 + $0x38] sm:$0xff]
    %v166 = vld [vmem:[#allocation4 + $0x40] sm:$0xff]
    %v167 = vld [vmem:[#allocation4 + $0x48] sm:$0xff]
    %v168 = vld [vmem:[#allocation4 + $0x50] sm:$0xff]
    %v169 = vld [vmem:[#allocation4 + $0x58] sm:$0xff]
    %v170 = vld [vmem:[#allocation4 + $0x60] sm:$0xff]
    %v171 = vld [vmem:[#allocation4 + $0x68] sm:$0xff]
    %v172 = vld [vmem:[#allocation4 + $0x70] sm:$0xff]
    %v173 = vld [vmem:[#allocation4 + $0x78] sm:$0xff]
    %v174 = vld [vmem:[%s4] sm:$0x1]
    %v176 = vlaneseq
    %v177 = vshrl.u32 %v176, 7
    %v178 = vsub.s32 0, %v177
    %v179 = vrot.slane %v174, %v178
    %181 = vmatprep.subr.mxu0 0.0
    %182 = vmatpush1.msra.mxu0 %v173
    %183 = vmatprep.subr.mxu0 0.0
    %184 = vmatpush1.msra.mxu0 %v172
    %185 = vmatprep.subr.mxu0 0.0
    %186 = vmatpush1.msra.mxu0 %v171
    %187 = vmatprep.subr.mxu0 0.0
    %188 = vmatpush1.msra.mxu0 %v170
    %189 = vmatprep.subr.mxu0 0.0
    %190 = vmatpush1.msra.mxu0 %v169
    %191 = vmatprep.subr.mxu0 0.0
    %192 = vmatpush1.msra.mxu0 %v168
    %193 = vmatprep.subr.mxu0 0.0
    %194 = vmatpush1.msra.mxu0 %v167
    %195 = vmatprep.subr.mxu0 0.0
    %196 = vmatpush1.msra.mxu0 %v166
    %197 = vmatprep.subr.mxu0 0.0
    %198 = vmatpush1.msra.mxu0 %v165
    %199 = vmatprep.subr.mxu0 0.0
    %200 = vmatpush1.msra.mxu0 %v164
    %201 = vmatprep.subr.mxu0 0.0
    %202 = vmatpush1.msra.mxu0 %v163
    %203 = vmatprep.subr.mxu0 0.0
    %204 = vmatpush1.msra.mxu0 %v162
    %205 = vmatprep.subr.mxu0 0.0
    %206 = vmatpush1.msra.mxu0 %v161
    %207 = vmatprep.subr.mxu0 0.0
    %208 = vmatpush1.msra.mxu0 %v160
    %209 = vmatprep.subr.mxu0 0.0
    %210 = vmatpush1.msra.mxu0 %v159
    %211 = vmatprep.subr.mxu0 0.0
    %212 = vmatpush1.msra.mxu0 %v158
    %213 = vmatprep.subr.mxu0 0.0
    %214 = vmatpush2.msra.mxu0 0.0
    %215 = vmatprep.subr.mxu0 0.0
    %216 = vmatpush2.msra.mxu0 0.0
    %217 = vmatprep.subr.mxu0 0.0
    %218 = vmatpush2.msra.mxu0 0.0
    %219 = vmatprep.subr.mxu0 0.0
    %220 = vmatpush2.msra.mxu0 0.0
    %221 = vmatprep.subr.mxu0 0.0
    %222 = vmatpush2.msra.mxu0 0.0
    %223 = vmatprep.subr.mxu0 0.0
    %224 = vmatpush2.msra.mxu0 0.0
    %225 = vmatprep.subr.mxu0 0.0
    %226 = vmatpush2.msra.mxu0 0.0
    %227 = vmatprep.subr.mxu0 0.0
    %228 = vmatpush2.msra.mxu0 0.0
    %229 = vmatprep.subr.mxu0 0.0
    %230 = vmatpush2.msra.mxu0 0.0
    %231 = vmatprep.subr.mxu0 0.0
    %232 = vmatpush2.msra.mxu0 0.0
    %233 = vmatprep.subr.mxu0 0.0
    %234 = vmatpush2.msra.mxu0 0.0
    %235 = vmatprep.subr.mxu0 0.0
    %236 = vmatpush2.msra.mxu0 0.0
    %237 = vmatprep.subr.mxu0 0.0
    %238 = vmatpush2.msra.mxu0 0.0
    %239 = vmatprep.subr.mxu0 0.0
    %240 = vmatpush2.msra.mxu0 0.0
    %241 = vmatprep.subr.mxu0 0.0
    %242 = vmatpush2.msra.mxu0 0.0
    %243 = vmatprep.subr.mxu0 0.0
    %244 = vmatpush2.msra.mxu0 0.0
    %245 = vmatprep.mubr.f32.mxu0 0.0
    %246 = vmatmul.mubr.f32.gmra.mxu0 %v157
    %v247 = vpop.f32.mrf.mxu0
    %v248 = vadd.f32 %v179, %v247
    %v249 = vpop.f32.mrf.mxu0
    %250 = vdwg.mxu0
    %v251 = vmax.f32 %v248, 0.0
    %v252 = vld [vmem:[#allocation6] sm:$0xff]
    %v253 = vld [vmem:[#allocation6 + $0x8] sm:$0xff]
    %v254 = vld [vmem:[#allocation6 + $0x10] sm:$0xff]
    %v255 = vld [vmem:[#allocation6 + $0x18] sm:$0xff]
    %v256 = vld [vmem:[#allocation6 + $0x20] sm:$0xff]
    %v257 = vld [vmem:[#allocation6 + $0x28] sm:$0xff]
    %v258 = vld [vmem:[#allocation6 + $0x30] sm:$0xff]
    %v259 = vld [vmem:[#allocation6 + $0x38] sm:$0xff]
    %v260 = vld [vmem:[#allocation6 + $0x40] sm:$0xff]
    %v261 = vld [vmem:[#allocation6 + $0x48] sm:$0xff]
    %v262 = vld [vmem:[#allocation6 + $0x50] sm:$0xff]
    %v263 = vld [vmem:[#allocation6 + $0x58] sm:$0xff]
    %v264 = vld [vmem:[#allocation6 + $0x60] sm:$0xff]
    %v265 = vld [vmem:[#allocation6 + $0x68] sm:$0xff]
    %v266 = vld [vmem:[#allocation6 + $0x70] sm:$0xff]
    %v267 = vld [vmem:[#allocation6 + $0x78] sm:$0xff]
    %v268 = vld [vmem:[#allocation6 + $0x80] sm:$0xff]
    %v269 = vld [vmem:[#allocation6 + $0x88] sm:$0xff]
    %v270 = vld [vmem:[#allocation6 + $0x90] sm:$0xff]
    %v271 = vld [vmem:[#allocation6 + $0x98] sm:$0xff]
    %v272 = vld [vmem:[#allocation6 + $0xa0] sm:$0xff]
    %v273 = vld [vmem:[#allocation6 + $0xa8] sm:$0xff]
    %v274 = vld [vmem:[#allocation6 + $0xb0] sm:$0xff]
    %v275 = vld [vmem:[#allocation6 + $0xb8] sm:$0xff]
    %v276 = vld [vmem:[#allocation6 + $0xc0] sm:$0xff]
    %v277 = vld [vmem:[#allocation6 + $0xc8] sm:$0xff]
    %v278 = vld [vmem:[#allocation6 + $0xd0] sm:$0xff]
    %v279 = vld [vmem:[#allocation6 + $0xd8] sm:$0xff]
    %v280 = vld [vmem:[#allocation6 + $0xe0] sm:$0xff]
    %v281 = vld [vmem:[#allocation6 + $0xe8] sm:$0xff]
    %v282 = vld [vmem:[#allocation6 + $0xf0] sm:$0xff]
    %v283 = vld [vmem:[#allocation6 + $0xf8] sm:$0xff]
    %v284 = vld [vmem:[#allocation6 + $0x100] sm:$0xff]
    %v285 = vld [vmem:[#allocation6 + $0x108] sm:$0xff]
    %v286 = vld [vmem:[#allocation6 + $0x110] sm:$0xff]
    %v287 = vld [vmem:[#allocation6 + $0x118] sm:$0xff]
    %v288 = vld [vmem:[#allocation6 + $0x120] sm:$0xff]
    %v289 = vld [vmem:[#allocation6 + $0x128] sm:$0xff]
    %v290 = vld [vmem:[#allocation6 + $0x130] sm:$0xff]
    %v291 = vld [vmem:[#allocation6 + $0x138] sm:$0xff]
    %v292 = vld [vmem:[#allocation6 + $0x140] sm:$0xff]
    %v293 = vld [vmem:[#allocation6 + $0x148] sm:$0xff]
    %v294 = vld [vmem:[#allocation6 + $0x150] sm:$0xff]
    %v295 = vld [vmem:[#allocation6 + $0x158] sm:$0xff]
    %v296 = vld [vmem:[#allocation6 + $0x160] sm:$0xff]
    %v297 = vld [vmem:[#allocation6 + $0x168] sm:$0xff]
    %v298 = vld [vmem:[#allocation6 + $0x170] sm:$0xff]
    %v299 = vld [vmem:[#allocation6 + $0x178] sm:$0xff]
    %v300 = vld [vmem:[#allocation6 + $0x180] sm:$0xff]
    %v301 = vld [vmem:[#allocation6 + $0x188] sm:$0xff]
    %v302 = vld [vmem:[#allocation6 + $0x190] sm:$0xff]
    %v303 = vld [vmem:[#allocation6 + $0x198] sm:$0xff]
    %v304 = vld [vmem:[#allocation6 + $0x1a0] sm:$0xff]
    %v305 = vld [vmem:[#allocation6 + $0x1a8] sm:$0xff]
    %v306 = vld [vmem:[#allocation6 + $0x1b0] sm:$0xff]
    %v307 = vld [vmem:[#allocation6 + $0x1b8] sm:$0xff]
    %v308 = vld [vmem:[#allocation6 + $0x1c0] sm:$0xff]
    %v309 = vld [vmem:[#allocation6 + $0x1c8] sm:$0xff]
    %v310 = vld [vmem:[#allocation6 + $0x1d0] sm:$0xff]
    %v311 = vld [vmem:[#allocation6 + $0x1d8] sm:$0xff]
    %v312 = vld [vmem:[#allocation6 + $0x1e0] sm:$0xff]
    %v313 = vld [vmem:[#allocation6 + $0x1e8] sm:$0xff]
    %v314 = vld [vmem:[#allocation6 + $0x1f0] sm:$0xff]
    %v315 = vld [vmem:[#allocation6 + $0x1f8] sm:$0xff]
    %v316 = vld [vmem:[#allocation6 + $0x200] sm:$0xff]
    %v317 = vld [vmem:[#allocation6 + $0x208] sm:$0xff]
    %v318 = vld [vmem:[#allocation6 + $0x210] sm:$0xff]
    %v319 = vld [vmem:[#allocation6 + $0x218] sm:$0xff]
    %v320 = vld [vmem:[#allocation6 + $0x220] sm:$0xff]
    %v321 = vld [vmem:[#allocation6 + $0x228] sm:$0xff]
    %v322 = vld [vmem:[#allocation6 + $0x230] sm:$0xff]
    %v323 = vld [vmem:[#allocation6 + $0x238] sm:$0xff]
    %v324 = vld [vmem:[#allocation6 + $0x240] sm:$0xff]
    %v325 = vld [vmem:[#allocation6 + $0x248] sm:$0xff]
    %v326 = vld [vmem:[#allocation6 + $0x250] sm:$0xff]
    %v327 = vld [vmem:[#allocation6 + $0x258] sm:$0xff]
    %v328 = vld [vmem:[#allocation6 + $0x260] sm:$0xff]
    %v329 = vld [vmem:[#allocation6 + $0x268] sm:$0xff]
    %v330 = vld [vmem:[#allocation6 + $0x270] sm:$0xff]
    %v331 = vld [vmem:[#allocation6 + $0x278] sm:$0xff]
    %v332 = vld [vmem:[#allocation6 + $0x280] sm:$0xff]
    %v333 = vld [vmem:[#allocation6 + $0x288] sm:$0xff]
    %v334 = vld [vmem:[#allocation6 + $0x290] sm:$0xff]
    %v335 = vld [vmem:[#allocation6 + $0x298] sm:$0xff]
    %v336 = vld [vmem:[#allocation6 + $0x2a0] sm:$0xff]
    %v337 = vld [vmem:[#allocation6 + $0x2a8] sm:$0xff]
    %v338 = vld [vmem:[#allocation6 + $0x2b0] sm:$0xff]
    %v339 = vld [vmem:[#allocation6 + $0x2b8] sm:$0xff]
    %v340 = vld [vmem:[#allocation6 + $0x2c0] sm:$0xff]
    %v341 = vld [vmem:[#allocation6 + $0x2c8] sm:$0xff]
    %v342 = vld [vmem:[#allocation6 + $0x2d0] sm:$0xff]
    %v343 = vld [vmem:[#allocation6 + $0x2d8] sm:$0xff]
    %v344 = vld [vmem:[#allocation6 + $0x2e0] sm:$0xff]
    %v345 = vld [vmem:[#allocation6 + $0x2e8] sm:$0xff]
    %v346 = vld [vmem:[#allocation6 + $0x2f0] sm:$0xff]
    %v347 = vld [vmem:[#allocation6 + $0x2f8] sm:$0xff]
    %v348 = vld [vmem:[#allocation6 + $0x300] sm:$0xff]
    %v349 = vld [vmem:[#allocation6 + $0x308] sm:$0xff]
    %v350 = vld [vmem:[#allocation6 + $0x310] sm:$0xff]
    %v351 = vld [vmem:[#allocation6 + $0x318] sm:$0xff]
    %v352 = vld [vmem:[#allocation6 + $0x320] sm:$0xff]
    %v353 = vld [vmem:[#allocation6 + $0x328] sm:$0xff]
    %v354 = vld [vmem:[#allocation6 + $0x330] sm:$0xff]
    %v355 = vld [vmem:[#allocation6 + $0x338] sm:$0xff]
    %v356 = vld [vmem:[#allocation6 + $0x340] sm:$0xff]
    %v357 = vld [vmem:[#allocation6 + $0x348] sm:$0xff]
    %v358 = vld [vmem:[#allocation6 + $0x350] sm:$0xff]
    %v359 = vld [vmem:[#allocation6 + $0x358] sm:$0xff]
    %v360 = vld [vmem:[#allocation6 + $0x360] sm:$0xff]
    %v361 = vld [vmem:[#allocation6 + $0x368] sm:$0xff]
    %v362 = vld [vmem:[#allocation6 + $0x370] sm:$0xff]
    %v363 = vld [vmem:[#allocation6 + $0x378] sm:$0xff]
    %v364 = vld [vmem:[%s6] sm:$0x7f]
    %v366 = vlaneseq
    %v367 = vshrl.u32 %v366, 7
    %v368 = vsub.s32 0, %v367
    %v369 = vrot.slane %v364, %v368
    %v370 = vlaneseq
    %v371 = vshrl.u32 %v370, 7
    %v372 = vsub.s32 1, %v371
    %v373 = vrot.slane %v364, %v372
    %v374 = vlaneseq
    %v375 = vshrl.u32 %v374, 7
    %v376 = vsub.s32 2, %v375
    %v377 = vrot.slane %v364, %v376
    %v378 = vlaneseq
    %v379 = vshrl.u32 %v378, 7
    %v380 = vsub.s32 3, %v379
    %v381 = vrot.slane %v364, %v380
    %v382 = vlaneseq
    %v383 = vshrl.u32 %v382, 7
    %v384 = vsub.s32 4, %v383
    %v385 = vrot.slane %v364, %v384
    %v386 = vlaneseq
    %v387 = vshrl.u32 %v386, 7
    %v388 = vsub.s32 5, %v387
    %v389 = vrot.slane %v364, %v388
    %v390 = vlaneseq
    %v391 = vshrl.u32 %v390, 7
    %v392 = vsub.s32 6, %v391
    %v393 = vrot.slane %v364, %v392
    %401 = vmatprep.subr.mxu0 %v358
    %402 = vmatpush1.msra.mxu0 %v357
    %403 = vmatprep.subr.mxu0 %v351
    %404 = vmatpush1.msra.mxu0 %v350
    %405 = vmatprep.subr.mxu0 %v344
    %406 = vmatpush1.msra.mxu0 %v343
    %407 = vmatprep.subr.mxu0 %v337
    %408 = vmatpush1.msra.mxu0 %v336
    %409 = vmatprep.subr.mxu0 %v330
    %410 = vmatpush1.msra.mxu0 %v329
    %411 = vmatprep.subr.mxu0 %v323
    %412 = vmatpush1.msra.mxu0 %v322
    %413 = vmatprep.subr.mxu0 %v316
    %414 = vmatpush1.msra.mxu0 %v315
    %415 = vmatprep.subr.mxu0 %v309
    %416 = vmatpush1.msra.mxu0 %v308
    %417 = vmatprep.subr.mxu0 %v302
    %418 = vmatpush1.msra.mxu0 %v301
    %419 = vmatprep.subr.mxu0 %v295
    %420 = vmatpush1.msra.mxu0 %v294
    %421 = vmatprep.subr.mxu0 %v288
    %422 = vmatpush1.msra.mxu0 %v287
    %423 = vmatprep.subr.mxu0 %v281
    %424 = vmatpush1.msra.mxu0 %v280
    %425 = vmatprep.subr.mxu0 %v274
    %426 = vmatpush1.msra.mxu0 %v273
    %427 = vmatprep.subr.mxu0 %v267
    %428 = vmatpush1.msra.mxu0 %v266
    %429 = vmatprep.subr.mxu0 %v260
    %430 = vmatpush1.msra.mxu0 %v259
    %431 = vmatprep.subr.mxu0 %v253
    %432 = vmatpush1.msra.mxu0 %v252
    %433 = vmatprep.subr.mxu0 0.0
    %434 = vmatpush2.msra.mxu0 0.0
    %435 = vmatprep.subr.mxu0 0.0
    %436 = vmatpush2.msra.mxu0 0.0
    %437 = vmatprep.subr.mxu0 0.0
    %438 = vmatpush2.msra.mxu0 0.0
    %439 = vmatprep.subr.mxu0 0.0
    %440 = vmatpush2.msra.mxu0 0.0
    %441 = vmatprep.subr.mxu0 0.0
    %442 = vmatpush2.msra.mxu0 0.0
    %443 = vmatprep.subr.mxu0 0.0
    %444 = vmatpush2.msra.mxu0 0.0
    %445 = vmatprep.subr.mxu0 0.0
    %446 = vmatpush2.msra.mxu0 0.0
    %447 = vmatprep.subr.mxu0 0.0
    %448 = vmatpush2.msra.mxu0 0.0
    %449 = vmatprep.subr.mxu0 0.0
    %450 = vmatpush2.msra.mxu0 0.0
    %451 = vmatprep.subr.mxu0 0.0
    %452 = vmatpush2.msra.mxu0 0.0
    %453 = vmatprep.subr.mxu0 0.0
    %454 = vmatpush2.msra.mxu0 0.0
    %455 = vmatprep.subr.mxu0 0.0
    %456 = vmatpush2.msra.mxu0 0.0
    %457 = vmatprep.subr.mxu0 0.0
    %458 = vmatpush2.msra.mxu0 0.0
    %459 = vmatprep.subr.mxu0 0.0
    %460 = vmatpush2.msra.mxu0 0.0
    %461 = vmatprep.subr.mxu0 0.0
    %462 = vmatpush2.msra.mxu0 0.0
    %463 = vmatprep.subr.mxu0 0.0
    %464 = vmatpush2.msra.mxu0 0.0
    %465 = vmatprep.mubr.f32.mxu0 0.0
    %466 = vmatmul.mubr.f32.gmra.mxu0 %v251
    %v467 = vpop.f32.mrf.mxu0
    %v468 = vadd.f32 %v369, %v467
    %v469 = vpop.f32.mrf.mxu0
    %v470 = vadd.f32 %v373, %v469
    %471 = vdwg.mxu0
    %472 = vmatprep.subr.mxu0 %v360
    %473 = vmatpush1.msra.mxu0 %v359
    %474 = vmatprep.subr.mxu0 %v353
    %475 = vmatpush1.msra.mxu0 %v352
    %476 = vmatprep.subr.mxu0 %v346
    %477 = vmatpush1.msra.mxu0 %v345
    %478 = vmatprep.subr.mxu0 %v339
    %479 = vmatpush1.msra.mxu0 %v338
    %480 = vmatprep.subr.mxu0 %v332
    %481 = vmatpush1.msra.mxu0 %v331
    %482 = vmatprep.subr.mxu0 %v325
    %483 = vmatpush1.msra.mxu0 %v324
    %484 = vmatprep.subr.mxu0 %v318
    %485 = vmatpush1.msra.mxu0 %v317
    %486 = vmatprep.subr.mxu0 %v311
    %487 = vmatpush1.msra.mxu0 %v310
    %488 = vmatprep.subr.mxu0 %v304
    %489 = vmatpush1.msra.mxu0 %v303
    %490 = vmatprep.subr.mxu0 %v297
    %491 = vmatpush1.msra.mxu0 %v296
    %492 = vmatprep.subr.mxu0 %v290
    %493 = vmatpush1.msra.mxu0 %v289
    %494 = vmatprep.subr.mxu0 %v283
    %495 = vmatpush1.msra.mxu0 %v282
    %496 = vmatprep.subr.mxu0 %v276
    %497 = vmatpush1.msra.mxu0 %v275
    %498 = vmatprep.subr.mxu0 %v269
    %499 = vmatpush1.msra.mxu0 %v268
    %500 = vmatprep.subr.mxu0 %v262
    %501 = vmatpush1.msra.mxu0 %v261
    %502 = vmatprep.subr.mxu0 %v255
    %503 = vmatpush1.msra.mxu0 %v254
    %504 = vmatprep.subr.mxu0 0.0
    %505 = vmatpush2.msra.mxu0 0.0
    %506 = vmatprep.subr.mxu0 0.0
    %507 = vmatpush2.msra.mxu0 0.0
    %508 = vmatprep.subr.mxu0 0.0
    %509 = vmatpush2.msra.mxu0 0.0
    %510 = vmatprep.subr.mxu0 0.0
    %511 = vmatpush2.msra.mxu0 0.0
    %512 = vmatprep.subr.mxu0 0.0
    %513 = vmatpush2.msra.mxu0 0.0
    %514 = vmatprep.subr.mxu0 0.0
    %515 = vmatpush2.msra.mxu0 0.0
    %516 = vmatprep.subr.mxu0 0.0
    %517 = vmatpush2.msra.mxu0 0.0
    %518 = vmatprep.subr.mxu0 0.0
    %519 = vmatpush2.msra.mxu0 0.0
    %520 = vmatprep.subr.mxu0 0.0
    %521 = vmatpush2.msra.mxu0 0.0
    %522 = vmatprep.subr.mxu0 0.0
    %523 = vmatpush2.msra.mxu0 0.0
    %524 = vmatprep.subr.mxu0 0.0
    %525 = vmatpush2.msra.mxu0 0.0
    %526 = vmatprep.subr.mxu0 0.0
    %527 = vmatpush2.msra.mxu0 0.0
    %528 = vmatprep.subr.mxu0 0.0
    %529 = vmatpush2.msra.mxu0 0.0
    %530 = vmatprep.subr.mxu0 0.0
    %531 = vmatpush2.msra.mxu0 0.0
    %532 = vmatprep.subr.mxu0 0.0
    %533 = vmatpush2.msra.mxu0 0.0
    %534 = vmatprep.subr.mxu0 0.0
    %535 = vmatpush2.msra.mxu0 0.0
    %536 = vmatprep.mubr.f32.mxu0 0.0
    %537 = vmatmul.mubr.f32.gmra.mxu0 %v251
    %v538 = vpop.f32.mrf.mxu0
    %v539 = vadd.f32 %v377, %v538
    %v540 = vpop.f32.mrf.mxu0
    %v541 = vadd.f32 %v381, %v540
    %542 = vdwg.mxu0
    %543 = vmatprep.subr.mxu0 %v362
    %544 = vmatpush1.msra.mxu0 %v361
    %545 = vmatprep.subr.mxu0 %v355
    %546 = vmatpush1.msra.mxu0 %v354
    %547 = vmatprep.subr.mxu0 %v348
    %548 = vmatpush1.msra.mxu0 %v347
    %549 = vmatprep.subr.mxu0 %v341
    %550 = vmatpush1.msra.mxu0 %v340
    %551 = vmatprep.subr.mxu0 %v334
    %552 = vmatpush1.msra.mxu0 %v333
    %553 = vmatprep.subr.mxu0 %v327
    %554 = vmatpush1.msra.mxu0 %v326
    %555 = vmatprep.subr.mxu0 %v320
    %556 = vmatpush1.msra.mxu0 %v319
    %557 = vmatprep.subr.mxu0 %v313
    %558 = vmatpush1.msra.mxu0 %v312
    %559 = vmatprep.subr.mxu0 %v306
    %560 = vmatpush1.msra.mxu0 %v305
    %561 = vmatprep.subr.mxu0 %v299
    %562 = vmatpush1.msra.mxu0 %v298
    %563 = vmatprep.subr.mxu0 %v292
    %564 = vmatpush1.msra.mxu0 %v291
    %565 = vmatprep.subr.mxu0 %v285
    %566 = vmatpush1.msra.mxu0 %v284
    %567 = vmatprep.subr.mxu0 %v278
    %568 = vmatpush1.msra.mxu0 %v277
    %569 = vmatprep.subr.mxu0 %v271
    %570 = vmatpush1.msra.mxu0 %v270
    %571 = vmatprep.subr.mxu0 %v264
    %572 = vmatpush1.msra.mxu0 %v263
    %573 = vmatprep.subr.mxu0 %v257
    %574 = vmatpush1.msra.mxu0 %v256
    %575 = vmatprep.subr.mxu0 0.0
    %576 = vmatpush2.msra.mxu0 0.0
    %577 = vmatprep.subr.mxu0 0.0
    %578 = vmatpush2.msra.mxu0 0.0
    %579 = vmatprep.subr.mxu0 0.0
    %580 = vmatpush2.msra.mxu0 0.0
    %581 = vmatprep.subr.mxu0 0.0
    %582 = vmatpush2.msra.mxu0 0.0
    %583 = vmatprep.subr.mxu0 0.0
    %584 = vmatpush2.msra.mxu0 0.0
    %585 = vmatprep.subr.mxu0 0.0
    %586 = vmatpush2.msra.mxu0 0.0
    %587 = vmatprep.subr.mxu0 0.0
    %588 = vmatpush2.msra.mxu0 0.0
    %589 = vmatprep.subr.mxu0 0.0
    %590 = vmatpush2.msra.mxu0 0.0
    %591 = vmatprep.subr.mxu0 0.0
    %592 = vmatpush2.msra.mxu0 0.0
    %593 = vmatprep.subr.mxu0 0.0
    %594 = vmatpush2.msra.mxu0 0.0
    %595 = vmatprep.subr.mxu0 0.0
    %596 = vmatpush2.msra.mxu0 0.0
    %597 = vmatprep.subr.mxu0 0.0
    %598 = vmatpush2.msra.mxu0 0.0
    %599 = vmatprep.subr.mxu0 0.0
    %600 = vmatpush2.msra.mxu0 0.0
    %601 = vmatprep.subr.mxu0 0.0
    %602 = vmatpush2.msra.mxu0 0.0
    %603 = vmatprep.subr.mxu0 0.0
    %604 = vmatpush2.msra.mxu0 0.0
    %605 = vmatprep.subr.mxu0 0.0
    %606 = vmatpush2.msra.mxu0 0.0
    %607 = vmatprep.mubr.f32.mxu0 0.0
    %608 = vmatmul.mubr.f32.gmra.mxu0 %v251
    %v609 = vpop.f32.mrf.mxu0
    %v610 = vadd.f32 %v385, %v609
    %v611 = vpop.f32.mrf.mxu0
    %v612 = vadd.f32 %v389, %v611
    %613 = vdwg.mxu0
    %614 = vmatprep.subr.mxu0 0.0
    %615 = vmatpush1.msra.mxu0 %v363
    %616 = vmatprep.subr.mxu0 0.0
    %617 = vmatpush1.msra.mxu0 %v356
    %618 = vmatprep.subr.mxu0 0.0
    %619 = vmatpush1.msra.mxu0 %v349
    %620 = vmatprep.subr.mxu0 0.0
    %621 = vmatpush1.msra.mxu0 %v342
    %622 = vmatprep.subr.mxu0 0.0
    %623 = vmatpush1.msra.mxu0 %v335
    %624 = vmatprep.subr.mxu0 0.0
    %625 = vmatpush1.msra.mxu0 %v328
    %626 = vmatprep.subr.mxu0 0.0
    %627 = vmatpush1.msra.mxu0 %v321
    %628 = vmatprep.subr.mxu0 0.0
    %629 = vmatpush1.msra.mxu0 %v314
    %630 = vmatprep.subr.mxu0 0.0
    %631 = vmatpush1.msra.mxu0 %v307
    %632 = vmatprep.subr.mxu0 0.0
    %633 = vmatpush1.msra.mxu0 %v300
    %634 = vmatprep.subr.mxu0 0.0
    %635 = vmatpush1.msra.mxu0 %v293
    %636 = vmatprep.subr.mxu0 0.0
    %637 = vmatpush1.msra.mxu0 %v286
    %638 = vmatprep.subr.mxu0 0.0
    %639 = vmatpush1.msra.mxu0 %v279
    %640 = vmatprep.subr.mxu0 0.0
    %641 = vmatpush1.msra.mxu0 %v272
    %642 = vmatprep.subr.mxu0 0.0
    %643 = vmatpush1.msra.mxu0 %v265
    %644 = vmatprep.subr.mxu0 0.0
    %645 = vmatpush1.msra.mxu0 %v258
    %646 = vmatprep.subr.mxu0 0.0
    %647 = vmatpush2.msra.mxu0 0.0
    %648 = vmatprep.subr.mxu0 0.0
    %649 = vmatpush2.msra.mxu0 0.0
    %650 = vmatprep.subr.mxu0 0.0
    %651 = vmatpush2.msra.mxu0 0.0
    %652 = vmatprep.subr.mxu0 0.0
    %653 = vmatpush2.msra.mxu0 0.0
    %654 = vmatprep.subr.mxu0 0.0
    %655 = vmatpush2.msra.mxu0 0.0
    %656 = vmatprep.subr.mxu0 0.0
    %657 = vmatpush2.msra.mxu0 0.0
    %658 = vmatprep.subr.mxu0 0.0
    %659 = vmatpush2.msra.mxu0 0.0
    %660 = vmatprep.subr.mxu0 0.0
    %661 = vmatpush2.msra.mxu0 0.0
    %662 = vmatprep.subr.mxu0 0.0
    %663 = vmatpush2.msra.mxu0 0.0
    %664 = vmatprep.subr.mxu0 0.0
    %665 = vmatpush2.msra.mxu0 0.0
    %666 = vmatprep.subr.mxu0 0.0
    %667 = vmatpush2.msra.mxu0 0.0
    %668 = vmatprep.subr.mxu0 0.0
    %669 = vmatpush2.msra.mxu0 0.0
    %670 = vmatprep.subr.mxu0 0.0
    %671 = vmatpush2.msra.mxu0 0.0
    %672 = vmatprep.subr.mxu0 0.0
    %673 = vmatpush2.msra.mxu0 0.0
    %674 = vmatprep.subr.mxu0 0.0
    %675 = vmatpush2.msra.mxu0 0.0
    %676 = vmatprep.subr.mxu0 0.0
    %677 = vmatpush2.msra.mxu0 0.0
    %678 = vmatprep.mubr.f32.mxu0 0.0
    %679 = vmatmul.mubr.f32.gmra.mxu0 %v251
    %v680 = vpop.f32.mrf.mxu0
    %v681 = vadd.f32 %v393, %v680
    %v682 = vpop.f32.mrf.mxu0
    %683 = vdwg.mxu0
    %v684 = vxor.u32 %v468, 2147483648
    %v685 = vxor.u32 %v470, 2147483648
    %v686 = vxor.u32 %v539, 2147483648
    %v687 = vxor.u32 %v541, 2147483648
    %v688 = vxor.u32 %v610, 2147483648
    %v689 = vxor.u32 %v612, 2147483648
    %v690 = vxor.u32 %v681, 2147483648
    %v691 = vmul.f32 %v684, 1.442695
    %v692 = vpow.pop %v691
    %v693 = vmul.f32 %v685, 1.442695
    %v694 = vpow.pop %v693
    %v695 = vmul.f32 %v686, 1.442695
    %v696 = vpow.pop %v695
    %v697 = vmul.f32 %v687, 1.442695
    %v698 = vpow.pop %v697
    %v699 = vmul.f32 %v688, 1.442695
    %v700 = vpow.pop %v699
    %v701 = vmul.f32 %v689, 1.442695
    %v702 = vpow.pop %v701
    %v703 = vmul.f32 %v690, 1.442695
    %v704 = vpow.pop %v703
    %v705 = vadd.f32 %v692, 1.0
    %v706 = vadd.f32 %v694, 1.0
    %v707 = vadd.f32 %v696, 1.0
    %v708 = vadd.f32 %v698, 1.0
    %v709 = vadd.f32 %v700, 1.0
    %v710 = vadd.f32 %v702, 1.0
    %v711 = vadd.f32 %v704, 1.0
    %v712 = vrcp.pop %v705
    %v713 = vmul.f32 1.0, %v712
    %v714 = vrcp.pop %v706
    %v715 = vmul.f32 1.0, %v714
    %v716 = vrcp.pop %v707
    %v717 = vmul.f32 1.0, %v716
    %v718 = vrcp.pop %v708
    %v719 = vmul.f32 1.0, %v718
    %v720 = vrcp.pop %v709
    %v721 = vmul.f32 1.0, %v720
    %v722 = vrcp.pop %v710
    %v723 = vmul.f32 1.0, %v722
    %v724 = vrcp.pop %v711
    %v725 = vmul.f32 1.0, %v724
    %v726 = vmul.f32 %v713, 255.0
    %v727 = vmul.f32 %v715, 255.0
    %v728 = vmul.f32 %v717, 255.0
    %v729 = vmul.f32 %v719, 255.0
    %v730 = vmul.f32 %v721, 255.0
    %v731 = vmul.f32 %v723, 255.0
    %v732 = vmul.f32 %v725, 255.0
    %733 = vst [vmem:[%s7] sm:$0xff] %v726
    %734 = vst [vmem:[%s7 + $0x8] sm:$0xff] %v727
    %735 = vst [vmem:[%s7 + $0x10] sm:$0xff] %v728
    %736 = vst [vmem:[%s7 + $0x18] sm:$0xff] %v729
    %737 = vst [vmem:[%s7 + $0x20] sm:$0xff] %v730
    %738 = vst [vmem:[%s7 + $0x28] sm:$0xff] %v731
    %vm739 = vcmask 130048
    %740 = vst.msk [vmem:[%s7 + $0x30] sm:$0xff] %vm739, %v732
    // Predicated region
    $region42: #{img_generator_forward.1} parent=1 // pred_check
      _
    $region43: #{img_generator_forward.1} parent=1 // pred_check_branch
      %742 = sbr.rel (0) target = $region45
    $region44: #{img_generator_forward.1} parent=1 // pred_region
      _
    $region45: #{img_generator_forward.1} parent=1 // pred_fallthru
      _
    // Predicated region
    $region46: #{img_generator_forward.1} parent=1 // pred_check
      _
    $region47: #{img_generator_forward.1} parent=1 // pred_check_branch
      %744 = sbr.rel (0) target = $region49
    $region48: #{img_generator_forward.1} parent=1 // pred_region
      _
    $region49: #{img_generator_forward.1} parent=1 // pred_fallthru
      _
    %745 = vsyncpa [#allocation3], 1
    %746 = vsyncpa [#allocation5], 1

</llo_original>
